<compile_context>
chip_gen: v7x
topology: tpu7x:2x2x1
jax: 0.10.0
libtpu: 0.0.40
codegen_flags: <defaults>
</compile_context>

<pallas_src>
import functools

import jax
import jax.numpy as jnp
from jax.experimental import pallas as pl
from jax.experimental.pallas import tpu as pltpu


def _gdice_stats_kernel(logits_ref, tgt_ref, inter_ref, psum_ref, tsum_ref,
                        *, mask_invalid):
    """Accumulate per-class dice statistics over one (sample, voxel-tile) grid step.

    logits_ref: (C, TR, 128) logits tile (native dtype, upcast here)
    tgt_ref   : (TR, 128)    int32 labels (-1 marks padded voxels)
    inter_ref : (C, 128) f32 resident accumulator of sum(p_c * onehot_c)
    psum_ref  : (C, 128) f32 resident accumulator of sum(p_c)
    tsum_ref  : (C, 128) f32 resident accumulator of sum(onehot_c)
    """
    first = (pl.program_id(0) == 0) & (pl.program_id(1) == 0)

    @pl.when(first)
    def _():
        inter_ref[...] = jnp.zeros_like(inter_ref)
        psum_ref[...] = jnp.zeros_like(psum_ref)
        tsum_ref[...] = jnp.zeros_like(tsum_ref)

    x = logits_ref[...].astype(jnp.float32)               # (C, TR, 128)
    c, tr, lanes = x.shape

    # Softmax over the class axis (axis 0 = leading, non-vreg axis -> pure VPU).
    m = jnp.max(x, axis=0, keepdims=True)
    e = jnp.exp(x - m)
    probs = e / jnp.sum(e, axis=0, keepdims=True)          # (C, TR, 128)

    tgt = tgt_ref[...]                                      # (TR, 128) int32
    class_ids = jax.lax.broadcasted_iota(jnp.int32, (c, tr, lanes), 0)
    onehot = (tgt[None, :, :] == class_ids).astype(jnp.float32)   # (C, TR, 128)

    if mask_invalid:
        # Padded voxels carry label -1: onehot is already 0, but probs must be
        # zeroed so the per-class prob sums exclude the padding.
        valid = (tgt >= 0).astype(jnp.float32)              # (TR, 128)
        probs = probs * valid[None, :, :]

    # Reduce only over the sublane (row) axis; accumulators stay lane-dense (C, 128).
    inter_ref[...] += jnp.sum(probs * onehot, axis=1)
    psum_ref[...] += jnp.sum(probs, axis=1)
    tsum_ref[...] += jnp.sum(onehot, axis=1)


def generalized_dice_loss(inputs, targets, organ_ids, *, tile_rows=64):
    """JAX/Pallas forward equivalent of GeneralizedDiceLoss4Organs.forward."""
    assert inputs.ndim == 5, inputs.shape
    assert targets.ndim == 4, targets.shape
    n, c, h, w, d = inputs.shape
    assert targets.shape == (n, h, w, d), (targets.shape, inputs.shape)
    assert c == len(organ_ids), "organIDs must match #classes (bg included)"

    lanes = 128
    m = h * w * d                                   # voxels per sample
    rows = pl.cdiv(m, lanes)                        # 128-lane rows needed
    rows_aligned = ((rows + 7) // 8) * 8            # sublane (8) alignment
    tr = min(int(tile_rows), rows_aligned)
    tr = max(8, (tr // 8) * 8)                      # multiple of 8
    rows_padded = pl.cdiv(rows_aligned, tr) * tr
    m_padded = rows_padded * lanes
    pad = m_padded - m

    # Free, copy-less reshapes: logits stay in their native (N, C, ...) layout/dtype.
    logits = inputs.reshape(n, c, m)
    tgt = targets.reshape(n, m).astype(jnp.int32)
    if pad:
        logits = jnp.pad(logits, ((0, 0), (0, 0), (0, pad)))
        tgt = jnp.pad(tgt, ((0, 0), (0, pad)), constant_values=-1)
    logits = logits.reshape(n, c, rows_padded, lanes)
    tgt = tgt.reshape(n, rows_padded, lanes)

    kernel = functools.partial(_gdice_stats_kernel, mask_invalid=bool(pad))

    grid = (n, rows_padded // tr)
    acc = jax.ShapeDtypeStruct((c, lanes), jnp.float32)
    acc_spec = pl.BlockSpec((c, lanes), lambda b, i: (0, 0))

    inter, psum, tsum = pl.pallas_call(
        kernel,
        out_shape=(acc, acc, acc),
        grid_spec=pltpu.PrefetchScalarGridSpec(
            num_scalar_prefetch=0,
            grid=grid,
            in_specs=[
                pl.BlockSpec((pl.Squeezed(), c, tr, lanes),
                             lambda b, i: (b, 0, i, 0)),
                pl.BlockSpec((pl.Squeezed(), tr, lanes),
                             lambda b, i: (b, i, 0)),
            ],
            out_specs=(acc_spec, acc_spec, acc_spec),
        ),
        compiler_params=pltpu.CompilerParams(
            dimension_semantics=("arbitrary", "arbitrary"),
        ),
    )(logits, tgt)

    # Tiny final reductions + generalized-dice weighting in plain JAX.
    intersect_c = jnp.sum(inter, axis=1)            # (C,)
    result_sum_c = jnp.sum(psum, axis=1)            # (C,)
    target_sum_c = jnp.sum(tsum, axis=1)            # (C,)

    eps = jnp.float32(1e-6)
    w_c = jnp.where(target_sum_c == 0.0,
                    jnp.float32(0.0),
                    1.0 / (target_sum_c * target_sum_c + eps))
    intersect = jnp.sum(w_c * intersect_c)
    union = jnp.sum(w_c * (result_sum_c + target_sum_c) + 2.0 * eps)
    iou = intersect / union
    out = 1.0 - 2.0 * iou
    return out.reshape(1).astype(jnp.float32)       # match PyTorch: tensor of size 1


def _reference_loss(inputs, targets, organ_ids):
    """Pure-JAX reference mirroring the PyTorch forward exactly."""
    n, c, h, w, d = inputs.shape
    probs = jax.nn.softmax(inputs.astype(jnp.float32), axis=1)
    onehot = jax.nn.one_hot(targets, c, axis=1, dtype=jnp.float32)
    eps = jnp.float32(1e-6)
    intersect = jnp.float32(0.0)
    union = jnp.float32(0.0)
    for cls in range(c):
        r = probs[:, cls].reshape(-1)
        t = onehot[:, cls].reshape(-1)
        t_sum = jnp.sum(t)
        w = jnp.where(t_sum == 0.0, jnp.float32(0.0), 1.0 / (t_sum * t_sum + eps))
        intersect = intersect + w * jnp.sum(r * t)
        union = union + w * (jnp.sum(r) + t_sum) + 2.0 * eps
    iou = intersect / union
    return (1.0 - 2.0 * iou).reshape(1)


if __name__ == "__main__":
    # Deterministic "module parameters": organ IDs (bg included), len == C.
    N, C, H, W, D = 2, 4, 8, 8, 16
    organ_ids = [0, 1, 2, 3]

    key = jax.random.PRNGKey(0)
    k_in, k_tg = jax.random.split(key)
    inputs = jax.random.normal(k_in, (N, C, H, W, D), dtype=jnp.float32)
    targets = jax.random.randint(k_tg, (N, H, W, D), 0, C, dtype=jnp.int32)

    loss = generalized_dice_loss(inputs, targets, organ_ids)
    loss = jax.block_until_ready(loss)

    ref = jax.block_until_ready(_reference_loss(inputs, targets, organ_ids))
    assert jnp.allclose(loss, ref, atol=1e-5, rtol=1e-5), (loss, ref)

    print("KERNEL_OK")
</pallas_src>

<mosaic_0001>
module attributes {stable_mosaic.version = 11 : i64} {
  func.func @_gdice_stats_kernel(%arg0: i32, %arg1: i32, %arg2: memref<1x4x8x128xf32, #tpu.memory_space<vmem>>, %arg3: memref<1x8x128xi32, #tpu.memory_space<vmem>>, %arg4: memref<4x128xf32, #tpu.memory_space<vmem>>, %arg5: memref<4x128xf32, #tpu.memory_space<vmem>>, %arg6: memref<4x128xf32, #tpu.memory_space<vmem>>) attributes {dimension_semantics = [#tpu.dimension_semantics<arbitrary>, #tpu.dimension_semantics<arbitrary>], iteration_bounds = array<i64: 2, 1>, scalar_prefetch = 0 : i64, scratch_operands = 0 : i64, tpu.core_type = #tpu.core_type<tc>, window_params = [{transform_indices = @transform_0, window_bounds = array<i64: 1, 4, 8, 128>}, {transform_indices = @transform_1, window_bounds = array<i64: 1, 8, 128>}, {pipeline_mode = #tpu.pipeline_mode<synchronous>, transform_indices = @transform_2, window_bounds = array<i64: 4, 128>}, {pipeline_mode = #tpu.pipeline_mode<synchronous>, transform_indices = @transform_3, window_bounds = array<i64: 4, 128>}, {pipeline_mode = #tpu.pipeline_mode<synchronous>, transform_indices = @transform_4, window_bounds = array<i64: 4, 128>}]} {
    %c0_i32 = arith.constant 0 : i32
    %0 = arith.cmpi eq, %arg0, %c0_i32 : i32
    %c0_i32_0 = arith.constant 0 : i32
    %1 = arith.cmpi eq, %arg1, %c0_i32_0 : i32
    %2 = arith.andi %0, %1 : i1
    %3 = arith.extui %2 : i1 to i32
    %c0_i32_1 = arith.constant 0 : i32
    %4 = arith.cmpi ne, %3, %c0_i32_1 : i32
    scf.if %4 {
      %cst_24 = arith.constant 0.000000e+00 : f32
      %37 = vector.broadcast %cst_24 : f32 to vector<4x128xf32>
      %c0_25 = arith.constant 0 : index
      %c0_26 = arith.constant 0 : index
      %38 = vector.load %arg4[%c0_25, %c0_26] : memref<4x128xf32, #tpu.memory_space<vmem>>, vector<4x128xf32>
      tpu.vector_store %arg4[%c0_25, %c0_26], %37 {strides = array<i32>} : memref<4x128xf32, #tpu.memory_space<vmem>>, vector<4x128xf32>,
      %cst_27 = arith.constant 0.000000e+00 : f32
      %39 = vector.broadcast %cst_27 : f32 to vector<4x128xf32>
      %c0_28 = arith.constant 0 : index
      %c0_29 = arith.constant 0 : index
      %40 = vector.load %arg5[%c0_28, %c0_29] : memref<4x128xf32, #tpu.memory_space<vmem>>, vector<4x128xf32>
      tpu.vector_store %arg5[%c0_28, %c0_29], %39 {strides = array<i32>} : memref<4x128xf32, #tpu.memory_space<vmem>>, vector<4x128xf32>,
      %cst_30 = arith.constant 0.000000e+00 : f32
      %41 = vector.broadcast %cst_30 : f32 to vector<4x128xf32>
      %c0_31 = arith.constant 0 : index
      %c0_32 = arith.constant 0 : index
      %42 = vector.load %arg6[%c0_31, %c0_32] : memref<4x128xf32, #tpu.memory_space<vmem>>, vector<4x128xf32>
      tpu.vector_store %arg6[%c0_31, %c0_32], %41 {strides = array<i32>} : memref<4x128xf32, #tpu.memory_space<vmem>>, vector<4x128xf32>,
    } else {
    }
    %c0 = arith.constant 0 : index
    %c0_2 = arith.constant 0 : index
    %c0_3 = arith.constant 0 : index
    %c0_4 = arith.constant 0 : index
    %5 = vector.load %arg2[%c0, %c0_2, %c0_3, %c0_4] : memref<1x4x8x128xf32, #tpu.memory_space<vmem>>, vector<1x4x8x128xf32>
    %6 = vector.shape_cast %5 : vector<1x4x8x128xf32> to vector<4x8x128xf32>
    %cst = arith.constant dense<0xFF800000> : vector<8x128xf32>
    %7 = vector.multi_reduction <maximumf>, %6, %cst [0] : vector<4x8x128xf32> to vector<8x128xf32>
    %8 = vector.shape_cast %7 : vector<8x128xf32> to vector<1x8x128xf32>
    %9 = vector.broadcast %8 : vector<1x8x128xf32> to vector<4x8x128xf32>
    %10 = arith.subf %6, %9 : vector<4x8x128xf32>
    %11 = math.exp %10 : vector<4x8x128xf32>
    %cst_5 = arith.constant dense<0.000000e+00> : vector<8x128xf32>
    %12 = vector.multi_reduction <add>, %11, %cst_5 [0] : vector<4x8x128xf32> to vector<8x128xf32>
    %13 = vector.shape_cast %12 : vector<8x128xf32> to vector<1x8x128xf32>
    %14 = vector.broadcast %13 : vector<1x8x128xf32> to vector<4x8x128xf32>
    %15 = arith.divf %11, %14 : vector<4x8x128xf32>
    %c0_6 = arith.constant 0 : index
    %c0_7 = arith.constant 0 : index
    %c0_8 = arith.constant 0 : index
    %16 = vector.load %arg3[%c0_6, %c0_7, %c0_8] : memref<1x8x128xi32, #tpu.memory_space<vmem>>, vector<1x8x128xi32>
    %17 = vector.shape_cast %16 : vector<1x8x128xi32> to vector<8x128xi32>
    %18 = tpu.iota {dimensions = array<i32: 0>} : vector<4x8x128xi32>
    %19 = vector.shape_cast %17 : vector<8x128xi32> to vector<1x8x128xi32>
    %20 = vector.broadcast %19 : vector<1x8x128xi32> to vector<4x8x128xi32>
    %21 = arith.cmpi eq, %20, %18 : vector<4x8x128xi32>
    %22 = arith.extui %21 : vector<4x8x128xi1> to vector<4x8x128xi32>
    %23 = arith.sitofp %22 : vector<4x8x128xi32> to vector<4x8x128xf32>
    %c0_9 = arith.constant 0 : index
    %c0_10 = arith.constant 0 : index
    %24 = vector.load %arg4[%c0_9, %c0_10] : memref<4x128xf32, #tpu.memory_space<vmem>>, vector<4x128xf32>
    %25 = arith.mulf %15, %23 : vector<4x8x128xf32>
    %cst_11 = arith.constant dense<0.000000e+00> : vector<4x128xf32>
    %26 = vector.multi_reduction <add>, %25, %cst_11 [1] : vector<4x8x128xf32> to vector<4x128xf32>
    %27 = arith.addf %24, %26 : vector<4x128xf32>
    %c0_12 = arith.constant 0 : index
    %c0_13 = arith.constant 0 : index
    %28 = vector.load %arg4[%c0_12, %c0_13] : memref<4x128xf32, #tpu.memory_space<vmem>>, vector<4x128xf32>
    tpu.vector_store %arg4[%c0_12, %c0_13], %27 {strides = array<i32>} : memref<4x128xf32, #tpu.memory_space<vmem>>, vector<4x128xf32>,
    %c0_14 = arith.constant 0 : index
    %c0_15 = arith.constant 0 : index
    %29 = vector.load %arg5[%c0_14, %c0_15] : memref<4x128xf32, #tpu.memory_space<vmem>>, vector<4x128xf32>
    %cst_16 = arith.constant dense<0.000000e+00> : vector<4x128xf32>
    %30 = vector.multi_reduction <add>, %15, %cst_16 [1] : vector<4x8x128xf32> to vector<4x128xf32>
    %31 = arith.addf %29, %30 : vector<4x128xf32>
    %c0_17 = arith.constant 0 : index
    %c0_18 = arith.constant 0 : index
    %32 = vector.load %arg5[%c0_17, %c0_18] : memref<4x128xf32, #tpu.memory_space<vmem>>, vector<4x128xf32>
    tpu.vector_store %arg5[%c0_17, %c0_18], %31 {strides = array<i32>} : memref<4x128xf32, #tpu.memory_space<vmem>>, vector<4x128xf32>,
    %c0_19 = arith.constant 0 : index
    %c0_20 = arith.constant 0 : index
    %33 = vector.load %arg6[%c0_19, %c0_20] : memref<4x128xf32, #tpu.memory_space<vmem>>, vector<4x128xf32>
    %cst_21 = arith.constant dense<0.000000e+00> : vector<4x128xf32>
    %34 = vector.multi_reduction <add>, %23, %cst_21 [1] : vector<4x8x128xf32> to vector<4x128xf32>
    %35 = arith.addf %33, %34 : vector<4x128xf32>
    %c0_22 = arith.constant 0 : index
    %c0_23 = arith.constant 0 : index
    %36 = vector.load %arg6[%c0_22, %c0_23] : memref<4x128xf32, #tpu.memory_space<vmem>>, vector<4x128xf32>
    tpu.vector_store %arg6[%c0_22, %c0_23], %35 {strides = array<i32>} : memref<4x128xf32, #tpu.memory_space<vmem>>, vector<4x128xf32>,
    return
  }
  func.func @transform_0(%arg0: i32, %arg1: i32) -> (i32, i32, i32, i32) {
    %c0_i32 = arith.constant 0 : i32
    %c0_i32_0 = arith.constant 0 : i32
    %c0_i32_1 = arith.constant 0 : i32
    return %arg0, %c0_i32, %arg1, %c0_i32_0 : i32, i32, i32, i32
  }
  func.func @transform_1(%arg0: i32, %arg1: i32) -> (i32, i32, i32) {
    %c0_i32 = arith.constant 0 : i32
    %c0_i32_0 = arith.constant 0 : i32
    return %arg0, %arg1, %c0_i32 : i32, i32, i32
  }
  func.func @transform_2(%arg0: i32, %arg1: i32) -> (i32, i32) {
    %c0_i32 = arith.constant 0 : i32
    %c0_i32_0 = arith.constant 0 : i32
    %c0_i32_1 = arith.constant 0 : i32
    return %c0_i32, %c0_i32_0 : i32, i32
  }
  func.func @transform_3(%arg0: i32, %arg1: i32) -> (i32, i32) {
    %c0_i32 = arith.constant 0 : i32
    %c0_i32_0 = arith.constant 0 : i32
    %c0_i32_1 = arith.constant 0 : i32
    return %c0_i32, %c0_i32_0 : i32, i32
  }
  func.func @transform_4(%arg0: i32, %arg1: i32) -> (i32, i32) {
    %c0_i32 = arith.constant 0 : i32
    %c0_i32_0 = arith.constant 0 : i32
    %c0_i32_1 = arith.constant 0 : i32
    return %c0_i32, %c0_i32_0 : i32, i32
  }
}

</mosaic_0001>

<llo_original>
// kernel: tpu_custom_call.1
$region0: #{tpu_custom_call.1}
  #allocation0 [shape = 'u32[]', space=smem, size = 0x4, offset = 0x4, fixed_abs, tag = 'smem constant byte address 0x4 - core index']
  #allocation1 [shape = 'u32[144,128]{1,0:T(1,128)}', space=vmem, size = 0x12000, scoped, tag = 'internal scratch']
  %s0 = inlined_call_operand.hbm [shape: f32[2,4,8,128], index: 0, kind: input, shape index: {}]
  %s1 = inlined_call_operand.hbm [shape: s32[2,8,128], index: 1, kind: input, shape index: {}]
  %s2 = inlined_call_operand.hbm [shape: f32[4,128], index: 2, kind: output, shape index: {0}]
  %s3 = inlined_call_operand.hbm [shape: f32[4,128], index: 3, kind: output, shape index: {1}]
  %s4 = inlined_call_operand.hbm [shape: f32[4,128], index: 4, kind: output, shape index: {2}]
  %5 = xla_tuple %s2, %s3, %s4
  %s6 = sld [smem:[#allocation0]]
  $region69: #{tpu_custom_call.1} parent=0
    _
  %s8 = ssub.s32 1, %s6
  %s9 = scalar_select 0, %s8, %s6
  $region1: #{tpu_custom_call.1} parent=0
    #allocation2 [shape = 'u8[32768]{0}', space=vmem, size = 0x8000, scoped, tag = 'input window, operand 0']
    #allocation3 [shape = 's32[2]{0}', space=sflag, size = 0x8, scoped, tag = 'scoped memory for tpu_custom_call.1']
    #allocation4 [shape = 's32[2]{0}', space=sflag, size = 0x8, scoped, tag = 'scoped memory for tpu_custom_call.1']
    #allocation5 [shape = 'u8[8192]{0}', space=vmem, size = 0x2000, scoped, tag = 'input window, operand 1']
    #allocation6 [shape = 's32[2]{0}', space=sflag, size = 0x8, scoped, tag = 'scoped memory for tpu_custom_call.1']
    #allocation7 [shape = 'u8[2048]{0}', space=vmem, size = 0x800, scoped, tag = 'output window, operand 0, single buffered']
    #allocation8 [shape = 'u8[2048]{0}', space=vmem, size = 0x800, scoped, tag = 'output window, operand 1, single buffered']
    #allocation9 [shape = 's32[1]{0}', space=sflag, size = 0x4, scoped, tag = 'scoped memory for tpu_custom_call.1']
    #allocation10 [shape = 'u8[2048]{0}', space=vmem, size = 0x800, scoped, tag = 'output window, operand 2, single buffered']
    %10 = vsyncpa [#allocation3], 0
    %s11 = scalar_lea.sflag [#allocation3], 1
    %12 = vsyncpa %s11, 0
    %13 = vsyncpa [#allocation6], 0
    %s14 = scalar_lea.sflag [#allocation6], 1
    %15 = vsyncpa %s14, 0
    %16 = vsyncpa [#allocation4], 0
    %17 = vsyncpa [#allocation9], 0
    loop: start=0, step=1, limit=4
    $region2: #{tpu_custom_call.1} parent=1 // loop_pre_header
      _
    $region3: #{tpu_custom_call.1} parent=1 // loop_header
      %s19 = sphi 0, %s23
      %p20 = scmp.ge.s32.totalorder %s19, 4
      %s26 = sphi 0, %s38
      %s27 = sphi 0, %s34
      %s28 = sphi 0, %s26
      %s29 = sphi 0, %s27
      %s30 = sphi 0, %s28
      %s31 = sphi 0, %s29
      %s43 = sphi 0, %s45
      %s46 = sphi 0, %s43
      %s47 = sphi 0, %s46
      %s63 = sphi 0, %s47
      %s71 = sphi 0, %s73
      %s74 = sphi 0, %s71
      %s75 = sphi 0, %s74
      %s91 = sphi 0, %s75
      %s95 = sphi 0, %s95
      %s97 = sphi 0, %s95
      %s98 = sphi 0, %s97
      %s112 = sphi 0, %s98
      %s116 = sphi 0, %s116
      %s118 = sphi 0, %s116
      %s119 = sphi 0, %s118
      %s133 = sphi 0, %s119
      %s137 = sphi 0, %s137
      %s139 = sphi 0, %s137
      %s140 = sphi 0, %s139
      %s154 = sphi 0, %s140
    $region4: #{tpu_custom_call.1} parent=1 // loop_header_branch
      %22 = sbr.rel (%p20) target = $region8
    $region5: #{tpu_custom_call.1} parent=1 // loop_body
      %s24 = ssub.s32 %s19, 1
      %s25 = ssub.s32 %s19, 2
      %s32 = sadd.s32 1, %s27
      %p33 = scmp.ge.s32.totalorder %s32, 1
      %s34 = scalar_select %p33, 0, %s32
      %s35 = sadd.s32 1, %s26
      %s36 = scalar_select %p33, %s35, %s26
      %p37 = scmp.ge.s32.totalorder %s36, 2
      %s38 = scalar_select %p37, 0, %s36
      %s39 = ssub.s32 %s26, %s38
      %s40 = ssub.s32 %s27, %s34
      %s41 = sor.u32 %s39, %s40
      %p42 = scmp.eq.s32.totalorder %s41, 0
      %s44 = sadd.s32 %s43, 1
      %s45 = scalar_select %p42, %s43, %s44
      %p48 = pneg %p42
      %p49 = scmp.eq.s32.totalorder %s19, 1
      %p50 = por %p48, %p49
      %p51 = scmp.ne.s32.totalorder %s43, %s46
      %p52 = scmp.eq.s32.totalorder %s19, 0
      %p53 = por %p51, %p52
      %p54 = scmp.ne.s32.totalorder %s43, %s46
      %p55 = scmp.eq.s32.totalorder %s24, 1
      %p56 = por %p54, %p55
      %p57 = scmp.ne.s32.totalorder %s46, %s47
      %p58 = scmp.eq.s32.totalorder %s24, 0
      %p59 = por %p57, %p58
      %p60 = scmp.ne.s32.totalorder %s46, %s47
      %p61 = scmp.eq.s32.totalorder %s25, 1
      %p62 = por %p60, %p61
      %p64 = scmp.ne.s32.totalorder %s47, %s63
      %p65 = scmp.eq.s32.totalorder %s25, 0
      %p66 = por %p64, %p65
      %s67 = ssub.s32 %s26, %s38
      %s68 = ssub.s32 %s27, %s34
      %s69 = sor.u32 %s67, %s68
      %p70 = scmp.eq.s32.totalorder %s69, 0
      %s72 = sadd.s32 %s71, 1
      %s73 = scalar_select %p70, %s71, %s72
      %p76 = pneg %p70
      %p77 = scmp.eq.s32.totalorder %s19, 1
      %p78 = por %p76, %p77
      %p79 = scmp.ne.s32.totalorder %s71, %s74
      %p80 = scmp.eq.s32.totalorder %s19, 0
      %p81 = por %p79, %p80
      %p82 = scmp.ne.s32.totalorder %s71, %s74
      %p83 = scmp.eq.s32.totalorder %s24, 1
      %p84 = por %p82, %p83
      %p85 = scmp.ne.s32.totalorder %s74, %s75
      %p86 = scmp.eq.s32.totalorder %s24, 0
      %p87 = por %p85, %p86
      %p88 = scmp.ne.s32.totalorder %s74, %s75
      %p89 = scmp.eq.s32.totalorder %s25, 1
      %p90 = por %p88, %p89
      %p92 = scmp.ne.s32.totalorder %s75, %s91
      %p93 = scmp.eq.s32.totalorder %s25, 0
      %p94 = por %p92, %p93
      %s96 = sadd.s32 %s95, 1
      %p99 = scmp.eq.s32.totalorder %s19, 1
      %p100 = scmp.ne.s32.totalorder %s95, %s97
      %p101 = scmp.eq.s32.totalorder %s19, 0
      %p102 = por %p100, %p101
      %p103 = scmp.ne.s32.totalorder %s95, %s97
      %p104 = scmp.eq.s32.totalorder %s24, 1
      %p105 = por %p103, %p104
      %p106 = scmp.ne.s32.totalorder %s97, %s98
      %p107 = scmp.eq.s32.totalorder %s24, 0
      %p108 = por %p106, %p107
      %p109 = scmp.ne.s32.totalorder %s97, %s98
      %p110 = scmp.eq.s32.totalorder %s25, 1
      %p111 = por %p109, %p110
      %p113 = scmp.ne.s32.totalorder %s98, %s112
      %p114 = scmp.eq.s32.totalorder %s25, 0
      %p115 = por %p113, %p114
      %s117 = sadd.s32 %s116, 1
      %p120 = scmp.eq.s32.totalorder %s19, 1
      %p121 = scmp.ne.s32.totalorder %s116, %s118
      %p122 = scmp.eq.s32.totalorder %s19, 0
      %p123 = por %p121, %p122
      %p124 = scmp.ne.s32.totalorder %s116, %s118
      %p125 = scmp.eq.s32.totalorder %s24, 1
      %p126 = por %p124, %p125
      %p127 = scmp.ne.s32.totalorder %s118, %s119
      %p128 = scmp.eq.s32.totalorder %s24, 0
      %p129 = por %p127, %p128
      %p130 = scmp.ne.s32.totalorder %s118, %s119
      %p131 = scmp.eq.s32.totalorder %s25, 1
      %p132 = por %p130, %p131
      %p134 = scmp.ne.s32.totalorder %s119, %s133
      %p135 = scmp.eq.s32.totalorder %s25, 0
      %p136 = por %p134, %p135
      %s138 = sadd.s32 %s137, 1
      %p141 = scmp.eq.s32.totalorder %s19, 1
      %p142 = scmp.ne.s32.totalorder %s137, %s139
      %p143 = scmp.eq.s32.totalorder %s19, 0
      %p144 = por %p142, %p143
      %p145 = scmp.ne.s32.totalorder %s137, %s139
      %p146 = scmp.eq.s32.totalorder %s24, 1
      %p147 = por %p145, %p146
      %p148 = scmp.ne.s32.totalorder %s139, %s140
      %p149 = scmp.eq.s32.totalorder %s24, 0
      %p150 = por %p148, %p149
      %p151 = scmp.ne.s32.totalorder %s139, %s140
      %p152 = scmp.eq.s32.totalorder %s25, 1
      %p153 = por %p151, %p152
      %p155 = scmp.ne.s32.totalorder %s140, %s154
      %p156 = scmp.eq.s32.totalorder %s25, 0
      %p157 = por %p155, %p156
      %p158 = scmp.le.s32.totalorder 1, %s19
      %p159 = scmp.lt.s32.totalorder %s19, 3
      %p160 = pnand %p158, %p159
      %p161 = pneg %p160
      // Predicated region
      $region9: #{tpu_custom_call.1} parent=5 // pred_check
        _
      $region10: #{tpu_custom_call.1} parent=5 // pred_check_branch
        %163 = sbr.rel (%p160) target = $region12
      $region11: #{tpu_custom_call.1} parent=5 // pred_region
        %s164 = ssub.s32 %s19, 1
      $region12: #{tpu_custom_call.1} parent=5 // pred_fallthru
        _
      %p165 = scmp.lt.s32.totalorder %s19, 2
      // Predicated region
      $region13: #{tpu_custom_call.1} parent=5 // pred_check
        %p166 = pneg %p165
      $region14: #{tpu_custom_call.1} parent=5 // pred_check_branch
        %168 = sbr.rel (%p166) target = $region16
      $region15: #{tpu_custom_call.1} parent=5 // pred_region
        // Predicated region
        $region17: #{tpu_custom_call.1} parent=15 // pred_check
          %p169 = pneg %p53
        $region18: #{tpu_custom_call.1} parent=15 // pred_check_branch
          %171 = sbr.rel (%p169) target = $region20
        $region19: #{tpu_custom_call.1} parent=15 // pred_region
          %s172 = sand.u32 %s43, 1
          %s173 = scalar_lea.sflag [#allocation3], %s172
          %s174 = sand.u32 %s43, 1
          %s175 = smul.addr %s174, 32
          %s176 = scalar_lea.vmem [#allocation2], %s175
          %s178 = ssub.s32 512, 512
          %179 = vsyncadd %s173, %s178
          %s180 = smul.addr %s26, 4
          %s181 = sadd.s32 %s27, %s180
          %s182 = smul.addr %s181, 128
          %s183 = scalar_lea.hbm %s0, %s182
          %s184 = sshll.u32 %s176, 4
          %s185 = int_to_ptr.vmem [resolvable:$true] %s184
          %190 = dma.hbm_to_vmem [thread:$0]  %s183, 512, %s185, %s173, 128, 128, 8
        $region20: #{tpu_custom_call.1} parent=15 // pred_fallthru
          _
        // Predicated region
        $region21: #{tpu_custom_call.1} parent=15 // pred_check
          %p191 = pneg %p81
        $region22: #{tpu_custom_call.1} parent=15 // pred_check_branch
          %193 = sbr.rel (%p191) target = $region24
        $region23: #{tpu_custom_call.1} parent=15 // pred_region
          %s194 = sand.u32 %s71, 1
          %s195 = scalar_lea.sflag [#allocation6], %s194
          %s196 = sand.u32 %s71, 1
          %s197 = smul.addr %s196, 8
          %s198 = scalar_lea.vmem [#allocation5], %s197
          %s200 = ssub.s32 128, 128
          %201 = vsyncadd %s195, %s200
          %s202 = sadd.s32 %s27, %s26
          %s203 = smul.addr %s202, 128
          %s204 = scalar_lea.hbm %s1, %s203
          %s206 = sshll.u32 %s198, 4
          %s207 = int_to_ptr.vmem [resolvable:$true] %s206
          %209 = dma.hbm_to_vmem [thread:$0]  %s204, 128, %s207, %s195
        $region24: #{tpu_custom_call.1} parent=15 // pred_fallthru
          _
      $region16: #{tpu_custom_call.1} parent=5 // pred_fallthru
        _
      %p210 = scmp.le.s32.totalorder 1, %s19
      %p211 = scmp.lt.s32.totalorder %s19, 3
      %p212 = pnand %p210, %p211
      %p213 = pneg %p212
      // Predicated region
      $region25: #{tpu_custom_call.1} parent=5 // pred_check
        _
      $region26: #{tpu_custom_call.1} parent=5 // pred_check_branch
        %215 = sbr.rel (%p212) target = $region28
      $region27: #{tpu_custom_call.1} parent=5 // pred_region
        %s216 = ssub.s32 %s19, 1
        %s217 = sand.u32 %s46, 1
        %s218 = scalar_lea.sflag [#allocation3], %s217
        %s219 = sand.u32 %s46, 1
        %s220 = smul.addr %s219, 32
        %s221 = scalar_lea.vmem [#allocation2], %s220
        // Predicated region
        $region29: #{tpu_custom_call.1} parent=27 // pred_check
          %p222 = pneg %p59
        $region30: #{tpu_custom_call.1} parent=27 // pred_check_branch
          %224 = sbr.rel (%p222) target = $region32
        $region31: #{tpu_custom_call.1} parent=27 // pred_region
          %225 = dma.done %s218, 512
        $region32: #{tpu_custom_call.1} parent=27 // pred_fallthru
          _
        %s226 = sand.u32 %s74, 1
        %s227 = scalar_lea.sflag [#allocation6], %s226
        %s228 = sand.u32 %s74, 1
        %s229 = smul.addr %s228, 8
        %s230 = scalar_lea.vmem [#allocation5], %s229
        // Predicated region
        $region33: #{tpu_custom_call.1} parent=27 // pred_check
          %p231 = pneg %p87
        $region34: #{tpu_custom_call.1} parent=27 // pred_check_branch
          %233 = sbr.rel (%p231) target = $region36
        $region35: #{tpu_custom_call.1} parent=27 // pred_region
          %234 = dma.done %s227, 128
        $region36: #{tpu_custom_call.1} parent=27 // pred_fallthru
          _
        %s235 = sand.u32 %s46, 1
        %s236 = scalar_lea.sflag [#allocation3], %s235
        %s237 = sand.u32 %s46, 1
        %s238 = smul.addr %s237, 32
        %s239 = scalar_lea.vmem [#allocation2], %s238
        %p240 = pneg %p59
        %p241 = pneg %p56
        %s242 = sand.u32 %s74, 1
        %s243 = scalar_lea.sflag [#allocation6], %s242
        %s244 = sand.u32 %s74, 1
        %s245 = smul.addr %s244, 8
        %s246 = scalar_lea.vmem [#allocation5], %s245
        %p247 = pneg %p87
        %p248 = pneg %p84
        %p249 = pneg %p108
        %p250 = pneg %p105
        %p251 = pneg %p129
        %p252 = pneg %p126
        %p253 = pneg %p150
        %p254 = pneg %p147
        %p255 = scmp.eq.s32.totalorder %s28, 0
        %p256 = scmp.eq.s32.totalorder %s29, 0
        %p257 = pnand %p255, %p256
        %p258 = pneg %p257
        // Predicated region
        $region37: #{tpu_custom_call.1} parent=27 // pred_check
          _
        $region38: #{tpu_custom_call.1} parent=27 // pred_check_branch
          %260 = sbr.rel (%p257) target = $region40
        $region39: #{tpu_custom_call.1} parent=27 // pred_region
          %261 = vst [vmem:[#allocation7] sm:$0xf] 0.0
          %262 = vst [vmem:[#allocation8] sm:$0xf] 0.0
          %263 = vst [vmem:[#allocation10] sm:$0xf] 0.0
        $region40: #{tpu_custom_call.1} parent=27 // pred_fallthru
          _
        %v264 = vld [vmem:[%s221] sm:$0xff]
        %v265 = vld [vmem:[%s221 + $0x8] sm:$0xff]
        %v266 = vld [vmem:[%s221 + $0x10] sm:$0xff]
        %v267 = vld [vmem:[%s221 + $0x18] sm:$0xff]
        %v268 = vmax.f32 %v264, %v265
        %v269 = vmax.f32 %v266, %v267
        %v270 = vmax.f32 %v268, %v269
        %v271 = vsub.f32 %v264, %v270
        %v272 = vsub.f32 %v265, %v270
        %v273 = vsub.f32 %v266, %v270
        %v274 = vsub.f32 %v267, %v270
        %v275 = vmul.f32 %v271, 1.442695
        %v276 = vpow.pop %v275
        %v277 = vmul.f32 %v272, 1.442695
        %v278 = vpow.pop %v277
        %v279 = vmul.f32 %v273, 1.442695
        %v280 = vpow.pop %v279
        %v281 = vmul.f32 %v274, 1.442695
        %v282 = vpow.pop %v281
        %v283 = vadd.f32 %v276, %v278
        %v284 = vadd.f32 %v283, %v280
        %v285 = vadd.f32 %v284, %v282
        %v286 = vrcp.pop %v285
        %v287 = vmul.f32 %v276, %v286
        %v288 = vmul.f32 %v278, %v286
        %v289 = vmul.f32 %v280, %v286
        %v290 = vmul.f32 %v282, %v286
        %v291 = vld [vmem:[%s230] sm:$0xff]
        %vm292 = vcmp.eq.s32.totalorder %v291, 0
        %vm293 = vcmp.eq.s32.totalorder %v291, 1
        %vm294 = vcmp.eq.s32.totalorder %v291, 2
        %vm295 = vcmp.eq.s32.totalorder %v291, 3
        %v296 = vsel %vm292, 1, 0
        %v297 = vsel %vm293, 1, 0
        %v298 = vsel %vm294, 1, 0
        %v299 = vsel %vm295, 1, 0
        %v300 = vcvt.s32.f32 %v296
        %v301 = vcvt.s32.f32 %v297
        %v302 = vcvt.s32.f32 %v298
        %v303 = vcvt.s32.f32 %v299
        %v304 = vld [vmem:[#allocation7] sm:$0xf]
        %v305 = vmul.f32 %v287, %v300
        %v306 = vmul.f32 %v288, %v301
        %v307 = vmul.f32 %v289, %v302
        %v308 = vmul.f32 %v290, %v303
        %v309 = vrot.slane %v305, 4
        %v310 = vadd.f32 %v305, %v309
        %v311 = vrot.slane %v310, 2
        %v312 = vadd.f32 %v310, %v311
        %v313 = vrot.slane %v312, 1
        %v314 = vadd.f32 %v312, %v313
        %v315 = vrot.slane %v306, 4
        %v316 = vadd.f32 %v306, %v315
        %v317 = vrot.slane %v316, 2
        %v318 = vadd.f32 %v316, %v317
        %v319 = vrot.slane %v318, 1
        %v320 = vadd.f32 %v318, %v319
        %v321 = vrot.slane %v307, 4
        %v322 = vadd.f32 %v307, %v321
        %v323 = vrot.slane %v322, 2
        %v324 = vadd.f32 %v322, %v323
        %v325 = vrot.slane %v324, 1
        %v326 = vadd.f32 %v324, %v325
        %v327 = vrot.slane %v308, 4
        %v328 = vadd.f32 %v308, %v327
        %v329 = vrot.slane %v328, 2
        %v330 = vadd.f32 %v328, %v329
        %v331 = vrot.slane %v330, 1
        %v332 = vadd.f32 %v330, %v331
        %vm337 = vcmask 1041409
        %v338 = vsel %vm337, %v320, %v314
        %vm339 = vcmask 1042434
        %v340 = vsel %vm339, %v326, %v338
        %vm341 = vcmask 1043459
        %v342 = vsel %vm341, %v332, %v340
        %v344 = vadd.f32 %v304, %v342
        %345 = vst [vmem:[#allocation7] sm:$0xf] %v344
        %v346 = vld [vmem:[#allocation8] sm:$0xf]
        %v347 = vrot.slane %v287, 4
        %v348 = vadd.f32 %v287, %v347
        %v349 = vrot.slane %v348, 2
        %v350 = vadd.f32 %v348, %v349
        %v351 = vrot.slane %v350, 1
        %v352 = vadd.f32 %v350, %v351
        %v353 = vrot.slane %v288, 4
        %v354 = vadd.f32 %v288, %v353
        %v355 = vrot.slane %v354, 2
        %v356 = vadd.f32 %v354, %v355
        %v357 = vrot.slane %v356, 1
        %v358 = vadd.f32 %v356, %v357
        %v359 = vrot.slane %v289, 4
        %v360 = vadd.f32 %v289, %v359
        %v361 = vrot.slane %v360, 2
        %v362 = vadd.f32 %v360, %v361
        %v363 = vrot.slane %v362, 1
        %v364 = vadd.f32 %v362, %v363
        %v365 = vrot.slane %v290, 4
        %v366 = vadd.f32 %v290, %v365
        %v367 = vrot.slane %v366, 2
        %v368 = vadd.f32 %v366, %v367
        %v369 = vrot.slane %v368, 1
        %v370 = vadd.f32 %v368, %v369
        %v375 = vsel %vm337, %v358, %v352
        %v376 = vsel %vm339, %v364, %v375
        %v377 = vsel %vm341, %v370, %v376
        %v379 = vadd.f32 %v346, %v377
        %380 = vst [vmem:[#allocation8] sm:$0xf] %v379
        %v381 = vld [vmem:[#allocation10] sm:$0xf]
        %v382 = vrot.slane %v300, 4
        %v383 = vadd.f32 %v300, %v382
        %v384 = vrot.slane %v383, 2
        %v385 = vadd.f32 %v383, %v384
        %v386 = vrot.slane %v385, 1
        %v387 = vadd.f32 %v385, %v386
        %v388 = vrot.slane %v301, 4
        %v389 = vadd.f32 %v301, %v388
        %v390 = vrot.slane %v389, 2
        %v391 = vadd.f32 %v389, %v390
        %v392 = vrot.slane %v391, 1
        %v393 = vadd.f32 %v391, %v392
        %v394 = vrot.slane %v302, 4
        %v395 = vadd.f32 %v302, %v394
        %v396 = vrot.slane %v395, 2
        %v397 = vadd.f32 %v395, %v396
        %v398 = vrot.slane %v397, 1
        %v399 = vadd.f32 %v397, %v398
        %v400 = vrot.slane %v303, 4
        %v401 = vadd.f32 %v303, %v400
        %v402 = vrot.slane %v401, 2
        %v403 = vadd.f32 %v401, %v402
        %v404 = vrot.slane %v403, 1
        %v405 = vadd.f32 %v403, %v404
        %v410 = vsel %vm337, %v393, %v387
        %v411 = vsel %vm339, %v399, %v410
        %v412 = vsel %vm341, %v405, %v411
        %v414 = vadd.f32 %v381, %v412
        %415 = vst [vmem:[#allocation10] sm:$0xf] %v414
        // Predicated region
        $region41: #{tpu_custom_call.1} parent=27 // pred_check
          %p416 = pneg %p105
        $region42: #{tpu_custom_call.1} parent=27 // pred_check_branch
          %418 = sbr.rel (%p416) target = $region44
        $region43: #{tpu_custom_call.1} parent=27 // pred_region
          %s420 = ssub.s32 64, 64
          %421 = vsyncadd [#allocation4], %s420
          %s423 = sshll.u32 [#allocation7], 4
          %s424 = int_to_ptr.vmem [resolvable:$true] %s423
          %426 = dma.vmem_to_hbm [thread:$0]  %s424, 64, %s2, [#allocation4]
        $region44: #{tpu_custom_call.1} parent=27 // pred_fallthru
          _
        // Predicated region
        $region45: #{tpu_custom_call.1} parent=27 // pred_check
          %p427 = pneg %p126
        $region46: #{tpu_custom_call.1} parent=27 // pred_check_branch
          %429 = sbr.rel (%p427) target = $region48
        $region47: #{tpu_custom_call.1} parent=27 // pred_region
          %s431 = ssub.s32 64, 64
          %432 = vsyncadd [#allocation9], %s431
          %s434 = sshll.u32 [#allocation8], 4
          %s435 = int_to_ptr.vmem [resolvable:$true] %s434
          %437 = dma.vmem_to_hbm [thread:$0]  %s435, 64, %s3, [#allocation9]
        $region48: #{tpu_custom_call.1} parent=27 // pred_fallthru
          _
        // Predicated region
        $region49: #{tpu_custom_call.1} parent=27 // pred_check
          %p438 = pneg %p147
        $region50: #{tpu_custom_call.1} parent=27 // pred_check_branch
          %440 = sbr.rel (%p438) target = $region52
        $region51: #{tpu_custom_call.1} parent=27 // pred_region
          %s442 = ssub.s32 64, 64
          %443 = vsyncadd [#allocation9], %s442
          %s445 = sshll.u32 [#allocation10], 4
          %s446 = int_to_ptr.vmem [resolvable:$true] %s445
          %448 = dma.vmem_to_hbm [thread:$0]  %s446, 64, %s4, [#allocation9]
        $region52: #{tpu_custom_call.1} parent=27 // pred_fallthru
          _
        // Predicated region
        $region53: #{tpu_custom_call.1} parent=27 // pred_check
          %p449 = pneg %p105
        $region54: #{tpu_custom_call.1} parent=27 // pred_check_branch
          %451 = sbr.rel (%p449) target = $region56
        $region55: #{tpu_custom_call.1} parent=27 // pred_region
          %452 = dma.done [#allocation4], 64
        $region56: #{tpu_custom_call.1} parent=27 // pred_fallthru
          _
        // Predicated region
        $region57: #{tpu_custom_call.1} parent=27 // pred_check
          %p453 = pneg %p126
        $region58: #{tpu_custom_call.1} parent=27 // pred_check_branch
          %455 = sbr.rel (%p453) target = $region60
        $region59: #{tpu_custom_call.1} parent=27 // pred_region
          %456 = dma.done [#allocation9], 64
        $region60: #{tpu_custom_call.1} parent=27 // pred_fallthru
          _
        // Predicated region
        $region61: #{tpu_custom_call.1} parent=27 // pred_check
          %p457 = pneg %p147
        $region62: #{tpu_custom_call.1} parent=27 // pred_check_branch
          %459 = sbr.rel (%p457) target = $region64
        $region63: #{tpu_custom_call.1} parent=27 // pred_region
          %460 = dma.done [#allocation9], 64
        $region64: #{tpu_custom_call.1} parent=27 // pred_fallthru
          _
      $region28: #{tpu_custom_call.1} parent=5 // pred_fallthru
        _
      %p461 = scmp.le.s32.totalorder 2, %s19
      // Predicated region
      $region65: #{tpu_custom_call.1} parent=5 // pred_check
        %p462 = pneg %p461
      $region66: #{tpu_custom_call.1} parent=5 // pred_check_branch
        %464 = sbr.rel (%p462) target = $region68
      $region67: #{tpu_custom_call.1} parent=5 // pred_region
        %s465 = ssub.s32 %s19, 2
      $region68: #{tpu_custom_call.1} parent=5 // pred_fallthru
        _
    $region6: #{tpu_custom_call.1} parent=1 // loop_footer
      %s23 = sadd.s32 1, %s19
    $region7: #{tpu_custom_call.1} parent=1 // loop_footer_branch
      %18 = sbr.rel target = $region3
    $region8: #{tpu_custom_call.1} parent=1 // loop_exit
      _
    %466 = vsyncpa [#allocation3], 1
    %s467 = scalar_lea.sflag [#allocation3], 1
    %468 = vsyncpa %s467, 1
    %469 = vsyncpa [#allocation6], 1
    %s470 = scalar_lea.sflag [#allocation6], 1
    %471 = vsyncpa %s470, 1
    %472 = vsyncpa [#allocation4], 1
    %s473 = scalar_lea.sflag [#allocation4], 1
    %474 = vsyncpa %s473, 1
    %475 = vsyncpa [#allocation9], 1

</llo_original>
